<compile_context>
chip_gen: v7x
topology: tpu7x:2x2x1
jax: 0.10.0
libtpu: 0.0.40
codegen_flags: <defaults>
</compile_context>

<pallas_src>
import functools

import jax
import jax.numpy as jnp
from jax import lax
from jax.experimental import pallas as pl
from jax.experimental.pallas import tpu as pltpu


def policy_net_kernel(x_ref, w1_ref, b1_ref, w2_ref, b2_ref, out_ref, *, action_dim):
    x = x_ref[...]            # (TILE_B, state_dim), state_dim is tiny (4)
    w1 = w1_ref[...]          # (state_dim, hidden)

    # ---- fc1 + ReLU on the VPU: K broadcast multiply-adds (K == state_dim). ----
    h = b1_ref[...]                                   # (1, hidden), broadcasts up
    for k in range(w1.shape[0]):                      # static unroll, K = 4
        h = h + x[:, k:k + 1] * w1[k:k + 1, :]
    h = jnp.maximum(h, 0.0)                           # (TILE_B, hidden)

    # ---- fc2 on the MXU, lane-dense (padded) output width. ----
    logits = jnp.dot(h, w2_ref[...], preferred_element_type=jnp.float32) + b2_ref[...]

    # ---- masked, numerically stable softmax over the first `action_dim` lanes. ----
    col = lax.broadcasted_iota(jnp.int32, logits.shape, 1)
    valid = col < action_dim
    masked = jnp.where(valid, logits, jnp.float32(-1e30))
    m = jnp.max(masked, axis=-1, keepdims=True)
    e = jnp.where(valid, jnp.exp(masked - m), 0.0)
    denom = jnp.sum(e, axis=-1, keepdims=True)
    out_ref[...] = (e * pl.reciprocal(denom, approx=True)).astype(out_ref.dtype)


def policy_net_forward(x, w1, b1, w2, b2, *, max_tile_b=512):
    """softmax(relu(x @ w1 + b1) @ w2 + b2, axis=1) via a single Pallas kernel.

    x:  (batch, state_dim)   w1: (state_dim, hidden)   b1: (1, hidden)
    w2: (hidden, action_dim) b2: (1, action_dim)
    """
    batch, state_dim = x.shape
    hidden = w1.shape[1]
    action_dim = w2.shape[1]

    LANE, SUBLANE = 128, 8
    n_pad = pl.cdiv(action_dim, LANE) * LANE          # lane-dense output width

    # Zero-pad fc2 weights/bias so the matmul result / store are lane-dense.
    w2_p = jnp.zeros((hidden, n_pad), w2.dtype).at[:, :action_dim].set(w2)
    b2_p = jnp.zeros((1, n_pad), b2.dtype).at[:, :action_dim].set(b2)

    # Sublane-aligned batch tile (multiple of 8, capped); pad batch up to it.
    tile_b = min(max_tile_b, pl.cdiv(batch, SUBLANE) * SUBLANE)
    padded_batch = pl.cdiv(batch, tile_b) * tile_b
    if padded_batch != batch:
        x = jnp.pad(x, ((0, padded_batch - batch), (0, 0)))

    grid = (padded_batch // tile_b,)
    kernel = functools.partial(policy_net_kernel, action_dim=action_dim)

    out = pl.pallas_call(
        kernel,
        out_shape=jax.ShapeDtypeStruct((padded_batch, n_pad), jnp.float32),
        grid_spec=pltpu.PrefetchScalarGridSpec(
            num_scalar_prefetch=0,
            grid=grid,
            in_specs=[
                pl.BlockSpec((tile_b, state_dim), lambda i: (i, 0)),   # activations stream
                pl.BlockSpec((state_dim, hidden), lambda i: (0, 0)),   # weights stay resident
                pl.BlockSpec((1, hidden), lambda i: (0, 0)),
                pl.BlockSpec((hidden, n_pad), lambda i: (0, 0)),
                pl.BlockSpec((1, n_pad), lambda i: (0, 0)),
            ],
            out_specs=pl.BlockSpec((tile_b, n_pad), lambda i: (i, 0)),
        ),
        compiler_params=pltpu.CompilerParams(
            dimension_semantics=("parallel",),
        ),
    )(x, w1, b1, w2_p, b2_p)

    # Slice back to the logical (batch, action_dim) probabilities.
    return out[:batch, :action_dim]


def init_params(key, state_dim, hidden_dim, action_dim):
    # Deterministic init mimicking torch.nn.Linear's U(-1/sqrt(fan_in), 1/sqrt(fan_in)).
    k1, k2, k3, k4 = jax.random.split(key, 4)
    bound1 = 1.0 / jnp.sqrt(state_dim)
    bound2 = 1.0 / jnp.sqrt(hidden_dim)
    w1 = jax.random.uniform(k1, (state_dim, hidden_dim), jnp.float32, -bound1, bound1)
    b1 = jax.random.uniform(k2, (1, hidden_dim), jnp.float32, -bound1, bound1)
    w2 = jax.random.uniform(k3, (hidden_dim, action_dim), jnp.float32, -bound2, bound2)
    b2 = jax.random.uniform(k4, (1, action_dim), jnp.float32, -bound2, bound2)
    return w1, b1, w2, b2


if __name__ == "__main__":
    # CartPole-v0: state_dim=4, action_dim=2; hidden_dim=128 as in the module.
    # TODO(synk): action sampling / log-prob of the RL loop lives outside forward().
    state_dim, hidden_dim, action_dim = 4, 128, 2
    batch = 2

    key = jax.random.PRNGKey(0)
    kx, kp = jax.random.split(key)
    x = jax.random.normal(kx, (batch, state_dim), jnp.float32)
    w1, b1, w2, b2 = init_params(kp, state_dim, hidden_dim, action_dim)

    out = policy_net_forward(x, w1, b1, w2, b2)
    out = jax.block_until_ready(out)

    # Reference check in plain JAX (approx reciprocal => slightly looser tol).
    h_ref = jnp.maximum(x @ w1 + b1, 0.0)
    ref = jax.nn.softmax(h_ref @ w2 + b2, axis=1)
    assert out.shape == (batch, action_dim)
    assert jnp.allclose(out, ref, atol=2e-3, rtol=2e-3), (out, ref)
    assert jnp.allclose(jnp.sum(out, axis=1), 1.0, atol=2e-3)

    print("KERNEL_OK")
</pallas_src>

<mosaic_0001>
module attributes {stable_mosaic.version = 11 : i64} {
  func.func @policy_net_kernel(%arg0: i32, %arg1: memref<8x4xf32, #tpu.memory_space<vmem>>, %arg2: memref<4x128xf32, #tpu.memory_space<vmem>>, %arg3: memref<1x128xf32, #tpu.memory_space<vmem>>, %arg4: memref<128x128xf32, #tpu.memory_space<vmem>>, %arg5: memref<1x128xf32, #tpu.memory_space<vmem>>, %arg6: memref<8x128xf32, #tpu.memory_space<vmem>>) attributes {dimension_semantics = [#tpu.dimension_semantics<parallel>], iteration_bounds = array<i64: 1>, scalar_prefetch = 0 : i64, scratch_operands = 0 : i64, tpu.core_type = #tpu.core_type<tc>, window_params = [{transform_indices = @transform_0, window_bounds = array<i64: 8, 4>}, {pipeline_mode = #tpu.pipeline_mode<synchronous>, transform_indices = @transform_1, window_bounds = array<i64: 4, 128>}, {pipeline_mode = #tpu.pipeline_mode<synchronous>, transform_indices = @transform_2, window_bounds = array<i64: 1, 128>}, {pipeline_mode = #tpu.pipeline_mode<synchronous>, transform_indices = @transform_3, window_bounds = array<i64: 128, 128>}, {pipeline_mode = #tpu.pipeline_mode<synchronous>, transform_indices = @transform_4, window_bounds = array<i64: 1, 128>}, {transform_indices = @transform_5, window_bounds = array<i64: 8, 128>}]} {
    %c0 = arith.constant 0 : index
    %c0_0 = arith.constant 0 : index
    %0 = vector.load %arg1[%c0, %c0_0] : memref<8x4xf32, #tpu.memory_space<vmem>>, vector<8x4xf32>
    %c0_1 = arith.constant 0 : index
    %c0_2 = arith.constant 0 : index
    %1 = vector.load %arg2[%c0_1, %c0_2] : memref<4x128xf32, #tpu.memory_space<vmem>>, vector<4x128xf32>
    %c0_3 = arith.constant 0 : index
    %c0_4 = arith.constant 0 : index
    %2 = vector.load %arg3[%c0_3, %c0_4] : memref<1x128xf32, #tpu.memory_space<vmem>>, vector<1x128xf32>
    %3 = vector.extract_strided_slice %0 {offsets = [0, 0], sizes = [8, 1], strides = [1, 1]} : vector<8x4xf32> to vector<8x1xf32>
    %4 = vector.extract_strided_slice %1 {offsets = [0, 0], sizes = [1, 128], strides = [1, 1]} : vector<4x128xf32> to vector<1x128xf32>
    %5 = vector.broadcast %3 : vector<8x1xf32> to vector<8x128xf32>
    %6 = vector.broadcast %4 : vector<1x128xf32> to vector<8x128xf32>
    %7 = arith.mulf %5, %6 : vector<8x128xf32>
    %8 = vector.broadcast %2 : vector<1x128xf32> to vector<8x128xf32>
    %9 = arith.addf %8, %7 : vector<8x128xf32>
    %10 = vector.extract_strided_slice %0 {offsets = [0, 1], sizes = [8, 1], strides = [1, 1]} : vector<8x4xf32> to vector<8x1xf32>
    %11 = vector.extract_strided_slice %1 {offsets = [1, 0], sizes = [1, 128], strides = [1, 1]} : vector<4x128xf32> to vector<1x128xf32>
    %12 = vector.broadcast %10 : vector<8x1xf32> to vector<8x128xf32>
    %13 = vector.broadcast %11 : vector<1x128xf32> to vector<8x128xf32>
    %14 = arith.mulf %12, %13 : vector<8x128xf32>
    %15 = arith.addf %9, %14 : vector<8x128xf32>
    %16 = vector.extract_strided_slice %0 {offsets = [0, 2], sizes = [8, 1], strides = [1, 1]} : vector<8x4xf32> to vector<8x1xf32>
    %17 = vector.extract_strided_slice %1 {offsets = [2, 0], sizes = [1, 128], strides = [1, 1]} : vector<4x128xf32> to vector<1x128xf32>
    %18 = vector.broadcast %16 : vector<8x1xf32> to vector<8x128xf32>
    %19 = vector.broadcast %17 : vector<1x128xf32> to vector<8x128xf32>
    %20 = arith.mulf %18, %19 : vector<8x128xf32>
    %21 = arith.addf %15, %20 : vector<8x128xf32>
    %22 = vector.extract_strided_slice %0 {offsets = [0, 3], sizes = [8, 1], strides = [1, 1]} : vector<8x4xf32> to vector<8x1xf32>
    %23 = vector.extract_strided_slice %1 {offsets = [3, 0], sizes = [1, 128], strides = [1, 1]} : vector<4x128xf32> to vector<1x128xf32>
    %24 = vector.broadcast %22 : vector<8x1xf32> to vector<8x128xf32>
    %25 = vector.broadcast %23 : vector<1x128xf32> to vector<8x128xf32>
    %26 = arith.mulf %24, %25 : vector<8x128xf32>
    %27 = arith.addf %21, %26 : vector<8x128xf32>
    %cst = arith.constant 0.000000e+00 : f32
    %28 = vector.broadcast %cst : f32 to vector<8x128xf32>
    %29 = arith.maximumf %27, %28 : vector<8x128xf32>
    %c0_5 = arith.constant 0 : index
    %c0_6 = arith.constant 0 : index
    %30 = vector.load %arg4[%c0_5, %c0_6] : memref<128x128xf32, #tpu.memory_space<vmem>>, vector<128x128xf32>
    %cst_7 = arith.constant dense<0.000000e+00> : vector<8x128xf32>
    %31 = tpu.matmul %29, %30, %cst_7 {dimension_numbers = #tpu.dot_dimension_numbers<[1], [0], [0], [1], [0, 0, 1, 1], [], []>} : vector<8x128xf32>, vector<128x128xf32>, vector<8x128xf32> -> vector<8x128xf32>
    %c0_8 = arith.constant 0 : index
    %c0_9 = arith.constant 0 : index
    %32 = vector.load %arg5[%c0_8, %c0_9] : memref<1x128xf32, #tpu.memory_space<vmem>>, vector<1x128xf32>
    %33 = vector.broadcast %32 : vector<1x128xf32> to vector<8x128xf32>
    %34 = arith.addf %31, %33 : vector<8x128xf32>
    %35 = tpu.iota {dimensions = array<i32: 1>} : vector<8x128xi32>
    %c2_i32 = arith.constant 2 : i32
    %36 = vector.broadcast %c2_i32 : i32 to vector<8x128xi32>
    %37 = arith.cmpi slt, %35, %36 : vector<8x128xi32>
    %cst_10 = arith.constant -1.000000e+30 : f32
    %38 = vector.broadcast %cst_10 : f32 to vector<8x128xf32>
    %39 = arith.select %37, %34, %38 : vector<8x128xi1>, vector<8x128xf32>
    %cst_11 = arith.constant dense<0xFF800000> : vector<8xf32>
    %40 = vector.multi_reduction <maximumf>, %39, %cst_11 [1] : vector<8x128xf32> to vector<8xf32>
    %41 = vector.shape_cast %40 : vector<8xf32> to vector<8x1xf32>
    %42 = vector.broadcast %41 : vector<8x1xf32> to vector<8x128xf32>
    %43 = arith.subf %39, %42 : vector<8x128xf32>
    %44 = math.exp %43 : vector<8x128xf32>
    %cst_12 = arith.constant 0.000000e+00 : f32
    %45 = vector.broadcast %cst_12 : f32 to vector<8x128xf32>
    %46 = arith.select %37, %44, %45 : vector<8x128xi1>, vector<8x128xf32>
    %cst_13 = arith.constant dense<0.000000e+00> : vector<8xf32>
    %47 = vector.multi_reduction <add>, %46, %cst_13 [1] : vector<8x128xf32> to vector<8xf32>
    %48 = vector.shape_cast %47 : vector<8xf32> to vector<8x1xf32>
    %49 = tpu.reciprocal %48 {approx = true} : vector<8x1xf32> -> vector<8x1xf32>
    %50 = vector.broadcast %49 : vector<8x1xf32> to vector<8x128xf32>
    %51 = arith.mulf %46, %50 : vector<8x128xf32>
    %c0_14 = arith.constant 0 : index
    %c0_15 = arith.constant 0 : index
    %52 = vector.load %arg6[%c0_14, %c0_15] : memref<8x128xf32, #tpu.memory_space<vmem>>, vector<8x128xf32>
    tpu.vector_store %arg6[%c0_14, %c0_15], %51 {strides = array<i32>} : memref<8x128xf32, #tpu.memory_space<vmem>>, vector<8x128xf32>,
    return
  }
  func.func @transform_0(%arg0: i32) -> (i32, i32) {
    %c0_i32 = arith.constant 0 : i32
    %c0_i32_0 = arith.constant 0 : i32
    return %arg0, %c0_i32 : i32, i32
  }
  func.func @transform_1(%arg0: i32) -> (i32, i32) {
    %c0_i32 = arith.constant 0 : i32
    %c0_i32_0 = arith.constant 0 : i32
    %c0_i32_1 = arith.constant 0 : i32
    return %c0_i32, %c0_i32_0 : i32, i32
  }
  func.func @transform_2(%arg0: i32) -> (i32, i32) {
    %c0_i32 = arith.constant 0 : i32
    %c0_i32_0 = arith.constant 0 : i32
    %c0_i32_1 = arith.constant 0 : i32
    return %c0_i32, %c0_i32_0 : i32, i32
  }
  func.func @transform_3(%arg0: i32) -> (i32, i32) {
    %c0_i32 = arith.constant 0 : i32
    %c0_i32_0 = arith.constant 0 : i32
    %c0_i32_1 = arith.constant 0 : i32
    return %c0_i32, %c0_i32_0 : i32, i32
  }
  func.func @transform_4(%arg0: i32) -> (i32, i32) {
    %c0_i32 = arith.constant 0 : i32
    %c0_i32_0 = arith.constant 0 : i32
    %c0_i32_1 = arith.constant 0 : i32
    return %c0_i32, %c0_i32_0 : i32, i32
  }
  func.func @transform_5(%arg0: i32) -> (i32, i32) {
    %c0_i32 = arith.constant 0 : i32
    %c0_i32_0 = arith.constant 0 : i32
    return %arg0, %c0_i32 : i32, i32
  }
}

</mosaic_0001>

<llo_original>
// kernel: tpu_custom_call.1
$region0: #{tpu_custom_call.1}
  #allocation0 [shape = 'u32[]', space=smem, size = 0x4, offset = 0x4, fixed_abs, tag = 'smem constant byte address 0x4 - core index']
  #allocation1 [shape = 'u32[144,128]{1,0:T(1,128)}', space=vmem, size = 0x12000, scoped, tag = 'internal scratch']
  %s0 = inlined_call_operand.vmem [shape: f32[8,4], index: 0, kind: input, shape index: {}]
  %s1 = inlined_call_operand.vmem [shape: f32[4,128], index: 1, kind: input, shape index: {}]
  %s2 = inlined_call_operand.vmem [shape: f32[1,128], index: 2, kind: input, shape index: {}]
  %s3 = inlined_call_operand.hbm [shape: f32[128,128], index: 3, kind: input, shape index: {}]
  %s4 = inlined_call_operand.vmem [shape: f32[1,128], index: 4, kind: input, shape index: {}]
  %s5 = inlined_call_operand.hbm [shape: f32[8,128], index: 5, kind: output, shape index: {}]
  %s6 = sld [smem:[#allocation0]]
  $region34: #{tpu_custom_call.1} parent=0
    _
  %s8 = ssub.s32 1, %s6
  %s9 = scalar_select 0, %s8, %s6
  $region1: #{tpu_custom_call.1} parent=0
    #allocation2 [shape = 'u8[65536]{0}', space=vmem, size = 0x10000, scoped, tag = 'input window, operand 3, single buffered']
    #allocation3 [shape = 's32[1]{0}', space=sflag, size = 0x4, scoped, tag = 'scoped memory for tpu_custom_call.1']
    #allocation4 [shape = 's32[1]{0}', space=sflag, size = 0x4, scoped, tag = 'scoped memory for tpu_custom_call.1']
    #allocation5 [shape = 'u8[4096]{0}', space=vmem, size = 0x1000, scoped, tag = 'output window, operand 0, single buffered']
    %10 = vsyncpa [#allocation3], 0
    %11 = vsyncpa [#allocation4], 0
    // Predicated region
    $region2: #{tpu_custom_call.1} parent=1 // pred_check
      _
    $region3: #{tpu_custom_call.1} parent=1 // pred_check_branch
      %13 = sbr.rel (0) target = $region5
    $region4: #{tpu_custom_call.1} parent=1 // pred_region
      _
    $region5: #{tpu_custom_call.1} parent=1 // pred_fallthru
      _
    // Predicated region
    $region6: #{tpu_custom_call.1} parent=1 // pred_check
      _
    $region7: #{tpu_custom_call.1} parent=1 // pred_check_branch
      %15 = sbr.rel (0) target = $region9
    $region8: #{tpu_custom_call.1} parent=1 // pred_region
      _
    $region9: #{tpu_custom_call.1} parent=1 // pred_fallthru
      _
    // Predicated region
    $region10: #{tpu_custom_call.1} parent=1 // pred_check
      _
    $region11: #{tpu_custom_call.1} parent=1 // pred_check_branch
      %17 = sbr.rel (0) target = $region13
    $region12: #{tpu_custom_call.1} parent=1 // pred_region
      _
    $region13: #{tpu_custom_call.1} parent=1 // pred_fallthru
      _
    // Predicated region
    $region14: #{tpu_custom_call.1} parent=1 // pred_check
      _
    $region15: #{tpu_custom_call.1} parent=1 // pred_check_branch
      %19 = sbr.rel (0) target = $region17
    $region16: #{tpu_custom_call.1} parent=1 // pred_region
      %s21 = ssub.s32 2048, 2048
      %22 = vsyncadd [#allocation3], %s21
      %s23 = sshll.u32 [#allocation2], 4
      %s24 = int_to_ptr.vmem [resolvable:$true] %s23
      %29 = dma.hbm_to_vmem [thread:$0]  %s3, 2048, %s24, [#allocation3], 128, 128, 8
    $region17: #{tpu_custom_call.1} parent=1 // pred_fallthru
      _
    // Predicated region
    $region18: #{tpu_custom_call.1} parent=1 // pred_check
      _
    $region19: #{tpu_custom_call.1} parent=1 // pred_check_branch
      %31 = sbr.rel (0) target = $region21
    $region20: #{tpu_custom_call.1} parent=1 // pred_region
      _
    $region21: #{tpu_custom_call.1} parent=1 // pred_fallthru
      _
    // Predicated region
    $region22: #{tpu_custom_call.1} parent=1 // pred_check
      _
    $region23: #{tpu_custom_call.1} parent=1 // pred_check_branch
      %33 = sbr.rel (0) target = $region25
    $region24: #{tpu_custom_call.1} parent=1 // pred_region
      %34 = dma.done [#allocation3], 2048
    $region25: #{tpu_custom_call.1} parent=1 // pred_fallthru
      _
    %v35 = vld [vmem:[%s0] sm:$0xff]
    %v36 = vld [vmem:[%s1] sm:$0xf]
    %v37 = vld [vmem:[%s2] sm:$0x1]
    %39 = vset.pattern.permute.xlu0 0
    %40 = vperm.xlu0 %39, %v35
    %v41 = vpop.permute.xlu0 %40
    %v43 = vlaneseq
    %v44 = vshrl.u32 %v43, 7
    %v45 = vsub.s32 0, %v44
    %v46 = vrot.slane %v36, %v45
    %v47 = vmul.f32 %v41, %v46
    %v49 = vlaneseq
    %v50 = vshrl.u32 %v49, 7
    %v51 = vsub.s32 0, %v50
    %v52 = vrot.slane %v37, %v51
    %v54 = vadd.f32 %v52, %v47
    %55 = vset.pattern.permute.xlu0 1
    %56 = vperm.xlu0 %55, %v35
    %v57 = vpop.permute.xlu0 %56
    %v59 = vlaneseq
    %v60 = vshrl.u32 %v59, 7
    %v61 = vsub.s32 1, %v60
    %v62 = vrot.slane %v36, %v61
    %v63 = vmul.f32 %v57, %v62
    %v64 = vadd.f32 %v54, %v63
    %65 = vset.pattern.permute.xlu0 2
    %66 = vperm.xlu0 %65, %v35
    %v67 = vpop.permute.xlu0 %66
    %v69 = vlaneseq
    %v70 = vshrl.u32 %v69, 7
    %v71 = vsub.s32 2, %v70
    %v72 = vrot.slane %v36, %v71
    %v73 = vmul.f32 %v67, %v72
    %v74 = vadd.f32 %v64, %v73
    %75 = vset.pattern.permute.xlu0 3
    %76 = vperm.xlu0 %75, %v35
    %v77 = vpop.permute.xlu0 %76
    %v79 = vlaneseq
    %v80 = vshrl.u32 %v79, 7
    %v81 = vsub.s32 3, %v80
    %v82 = vrot.slane %v36, %v81
    %v83 = vmul.f32 %v77, %v82
    %v84 = vadd.f32 %v74, %v83
    %v85 = vmax.f32 %v84, 0.0
    %v86 = vld [vmem:[#allocation2] sm:$0xff]
    %v87 = vld [vmem:[#allocation2 + $0x8] sm:$0xff]
    %v88 = vld [vmem:[#allocation2 + $0x10] sm:$0xff]
    %v89 = vld [vmem:[#allocation2 + $0x18] sm:$0xff]
    %v90 = vld [vmem:[#allocation2 + $0x20] sm:$0xff]
    %v91 = vld [vmem:[#allocation2 + $0x28] sm:$0xff]
    %v92 = vld [vmem:[#allocation2 + $0x30] sm:$0xff]
    %v93 = vld [vmem:[#allocation2 + $0x38] sm:$0xff]
    %v94 = vld [vmem:[#allocation2 + $0x40] sm:$0xff]
    %v95 = vld [vmem:[#allocation2 + $0x48] sm:$0xff]
    %v96 = vld [vmem:[#allocation2 + $0x50] sm:$0xff]
    %v97 = vld [vmem:[#allocation2 + $0x58] sm:$0xff]
    %v98 = vld [vmem:[#allocation2 + $0x60] sm:$0xff]
    %v99 = vld [vmem:[#allocation2 + $0x68] sm:$0xff]
    %v100 = vld [vmem:[#allocation2 + $0x70] sm:$0xff]
    %v101 = vld [vmem:[#allocation2 + $0x78] sm:$0xff]
    %v102 = vld [vmem:[%s4] sm:$0x1]
    %v104 = vlaneseq
    %v105 = vshrl.u32 %v104, 7
    %v106 = vsub.s32 0, %v105
    %v107 = vrot.slane %v102, %v106
    %109 = vmatprep.subr.mxu0 0.0
    %110 = vmatpush1.msra.mxu0 %v86
    %111 = vmatprep.subr.mxu0 0.0
    %112 = vmatpush1.msra.mxu0 %v87
    %113 = vmatprep.subr.mxu0 0.0
    %114 = vmatpush1.msra.mxu0 %v88
    %115 = vmatprep.subr.mxu0 0.0
    %116 = vmatpush1.msra.mxu0 %v89
    %117 = vmatprep.subr.mxu0 0.0
    %118 = vmatpush1.msra.mxu0 %v90
    %119 = vmatprep.subr.mxu0 0.0
    %120 = vmatpush1.msra.mxu0 %v91
    %121 = vmatprep.subr.mxu0 0.0
    %122 = vmatpush1.msra.mxu0 %v92
    %123 = vmatprep.subr.mxu0 0.0
    %124 = vmatpush1.msra.mxu0 %v93
    %125 = vmatprep.subr.mxu0 0.0
    %126 = vmatpush1.msra.mxu0 %v94
    %127 = vmatprep.subr.mxu0 0.0
    %128 = vmatpush1.msra.mxu0 %v95
    %129 = vmatprep.subr.mxu0 0.0
    %130 = vmatpush1.msra.mxu0 %v96
    %131 = vmatprep.subr.mxu0 0.0
    %132 = vmatpush1.msra.mxu0 %v97
    %133 = vmatprep.subr.mxu0 0.0
    %134 = vmatpush1.msra.mxu0 %v98
    %135 = vmatprep.subr.mxu0 0.0
    %136 = vmatpush1.msra.mxu0 %v99
    %137 = vmatprep.subr.mxu0 0.0
    %138 = vmatpush1.msra.mxu0 %v100
    %139 = vmatprep.subr.mxu0 0.0
    %140 = vmatpush1.msra.mxu0 %v101
    %141 = vmatprep.subr.mxu0 0.0
    %142 = vmatpush1.msra.mxu0 0.0
    %143 = vmatprep.subr.mxu0 0.0
    %144 = vmatpush1.msra.mxu0 0.0
    %145 = vmatprep.subr.mxu0 0.0
    %146 = vmatpush1.msra.mxu0 0.0
    %147 = vmatprep.subr.mxu0 0.0
    %148 = vmatpush1.msra.mxu0 0.0
    %149 = vmatprep.subr.mxu0 0.0
    %150 = vmatpush1.msra.mxu0 0.0
    %151 = vmatprep.subr.mxu0 0.0
    %152 = vmatpush1.msra.mxu0 0.0
    %153 = vmatprep.subr.mxu0 0.0
    %154 = vmatpush1.msra.mxu0 0.0
    %155 = vmatprep.subr.mxu0 0.0
    %156 = vmatpush1.msra.mxu0 0.0
    %157 = vmatprep.subr.mxu0 0.0
    %158 = vmatpush1.msra.mxu0 0.0
    %159 = vmatprep.subr.mxu0 0.0
    %160 = vmatpush1.msra.mxu0 0.0
    %161 = vmatprep.subr.mxu0 0.0
    %162 = vmatpush1.msra.mxu0 0.0
    %163 = vmatprep.subr.mxu0 0.0
    %164 = vmatpush1.msra.mxu0 0.0
    %165 = vmatprep.subr.mxu0 0.0
    %166 = vmatpush1.msra.mxu0 0.0
    %167 = vmatprep.subr.mxu0 0.0
    %168 = vmatpush1.msra.mxu0 0.0
    %169 = vmatprep.subr.mxu0 0.0
    %170 = vmatpush1.msra.mxu0 0.0
    %171 = vmatprep.subr.mxu0 0.0
    %172 = vmatpush1.msra.mxu0 0.0
    %173 = vmatprep.mubr.f32.mxu0 0.0
    %174 = vmatmul.mubr.f32.gmra.mrb[0].mxu0 %v85
    %v175 = vpop.f32.mrb[0].mxu0
    %v176 = vadd.f32 %v107, %v175
    %v177 = vpop.f32.mrb[0].mxu0
    %178 = vdwg.mxu0
    %v179 = vlaneseq
    %v180 = vand.u32 %v179, 127
    %vm181 = vcmp.lt.s32.totalorder %v180, 2
    %v182 = vsel %vm181, %v176, -1e+30
    %183 = vmax.xlane.f32.xlu0 %v182
    %v184 = vpop.xlane.xlu0 %183
    %v185 = vsub.f32 %v182, %v184
    %v186 = vmul.f32 %v185, 1.442695
    %v187 = vpow.pop %v186
    %v188 = vsel %vm181, %v187, 0.0
    %189 = vadd.xlane.f32.xlu0 %v188
    %v190 = vpop.xlane.xlu0 %189
    %v191 = vrcp.pop %v190
    %v192 = vmul.f32 %v188, %v191
    %193 = vst [vmem:[#allocation5] sm:$0xff] %v192
    // Predicated region
    $region26: #{tpu_custom_call.1} parent=1 // pred_check
      _
    $region27: #{tpu_custom_call.1} parent=1 // pred_check_branch
      %195 = sbr.rel (0) target = $region29
    $region28: #{tpu_custom_call.1} parent=1 // pred_region
      %s197 = ssub.s32 128, 128
      %198 = vsyncadd [#allocation4], %s197
      %s200 = sshll.u32 [#allocation5], 4
      %s201 = int_to_ptr.vmem [resolvable:$true] %s200
      %203 = dma.vmem_to_hbm [thread:$0]  %s201, 128, %s5, [#allocation4]
    $region29: #{tpu_custom_call.1} parent=1 // pred_fallthru
      _
    // Predicated region
    $region30: #{tpu_custom_call.1} parent=1 // pred_check
      _
    $region31: #{tpu_custom_call.1} parent=1 // pred_check_branch
      %205 = sbr.rel (0) target = $region33
    $region32: #{tpu_custom_call.1} parent=1 // pred_region
      %206 = dma.done [#allocation4], 128
    $region33: #{tpu_custom_call.1} parent=1 // pred_fallthru
      _
    %207 = vsyncpa [#allocation3], 1
    %208 = vsyncpa [#allocation4], 1

</llo_original>
